<compile_context>
chip_gen: v7x
topology: tpu7x:2x2x1
jax: 0.10.0
libtpu: 0.0.40
codegen_flags: <defaults>
</compile_context>

<pallas_src>
import functools

import jax
import jax.numpy as jnp
import numpy as np
from jax.experimental import pallas as pl
from jax.experimental.pallas import tpu as pltpu


class DefaultConfig:
    class_num = 3          # number of object classes
    theta_class_num = 4    # number of theta (orientation) classes
    T_a = 10.0             # angle normalizer (only used for a discarded value)


_SUB = 8 * 128  # positions per dense (8 sublane x 128 lane) f32 vreg tile


def _round_up(x, m):
    return ((x + m - 1) // m) * m


# --------------------------------------------------------------------------
# Pallas kernel: decode one tile of TN positions.
#
# Block shapes (lane = TN // 8):
#   cls_ref   (1, c_cls, 8, lane)
#   reg_ref   (1, 5,     8, lane)   rows: l, t, r, b, angle
#   tc_ref    (1, c_tc,  8, lane)
#   tr_ref    (1, 1,     8, lane)
#   const_ref (3,        8, lane)   rows: cx, cy, stride
#   out_ref   (1, 8,     8, lane)   rows: x1, y1, x2, y2, theta, score, cls, 0
# Every per-channel slice below is a dense (8, lane) tile -> full-vreg
# loads/stores, no sublane-masked vst.
# --------------------------------------------------------------------------
def _detect_kernel(cls_ref, reg_ref, tc_ref, tr_ref, const_ref, out_ref, *,
                   c_cls, c_tc):
    f32 = jnp.float32

    # ---- classification: argmax over raw logits (sigmoid is monotone);    ----
    # ---- sigmoid applied only to the winning logit to produce the score.  ----
    best = cls_ref[0, 0].astype(f32)                       # (8, lane)
    best_idx = jnp.zeros(best.shape, f32)
    for c in range(1, c_cls):
        v = cls_ref[0, c].astype(f32)
        m = v > best                                       # strict -> first-max tie-break
        best = jnp.where(m, v, best)
        best_idx = jnp.where(m, f32(c), best_idx)
    scores = jax.nn.sigmoid(best)
    classes = best_idx + 1.0

    # ---- theta branch: only the argmax is used (theta scores discarded). ----
    tbest = tc_ref[0, 0].astype(f32)
    t_idx = jnp.zeros(tbest.shape, f32)
    for c in range(1, c_tc):
        v = tc_ref[0, c].astype(f32)
        m = v > tbest
        tbest = jnp.where(m, v, tbest)
        t_idx = jnp.where(m, f32(c), t_idx)
    theta = (t_idx + 1.0) * 10.0 + tr_ref[0, 0].astype(f32)

    # ---- box decode: coords -/+ (ltrb * stride) ----
    cx = const_ref[0]
    cy = const_ref[1]
    st = const_ref[2]
    l = reg_ref[0, 0].astype(f32) * st
    t = reg_ref[0, 1].astype(f32) * st
    r = reg_ref[0, 2].astype(f32) * st
    b = reg_ref[0, 3].astype(f32) * st
    # (pred_theta = angle / T_a * 180.0 is computed and discarded in the
    #  reference; omitted since it never reaches an output.)

    out_ref[0, 0] = cx - l          # x1
    out_ref[0, 1] = cy - t          # y1
    out_ref[0, 2] = cx + r          # x2
    out_ref[0, 3] = cy + b          # y2
    out_ref[0, 4] = theta
    out_ref[0, 5] = scores
    out_ref[0, 6] = classes
    out_ref[0, 7] = jnp.zeros_like(scores)


# --------------------------------------------------------------------------
# JAX glue
# --------------------------------------------------------------------------
def _coords_fmap2orig(h, w, stride):
    """Replicates coords_fmap2orig: x-coords, y-coords of length h*w."""
    shifts_x = jnp.arange(0, w * stride, stride, dtype=jnp.float32)
    shifts_y = jnp.arange(0, h * stride, stride, dtype=jnp.float32)
    shift_y, shift_x = jnp.meshgrid(shifts_y, shifts_x, indexing="ij")
    cx = shift_x.reshape(-1) + stride // 2
    cy = shift_y.reshape(-1) + stride // 2
    return cx, cy


def _cat_levels(levels, n_pad):
    """[B,C,H,W] per level -> [B, C, n_pad] channel-first, tail zero-padded.

    The per-level reshape is a free row-major view; the concatenate is the
    single unavoidable packing pass (the zero tail rides inside it, so there
    is no separate jnp.pad pass over the full slab)."""
    B, C = levels[0].shape[:2]
    parts = [f.reshape(B, C, -1) for f in levels]
    n = sum(p.shape[-1] for p in parts)
    if n_pad > n:
        parts.append(jnp.zeros((B, C, n_pad - n), parts[0].dtype))
    return jnp.concatenate(parts, axis=-1)


class DetectHead:
    def __init__(self, score_threshold, nms_iou_threshold,
                 max_detection_boxes_num, strides, config=None,
                 max_tile_n=32768, vmem_limit_bytes=32 * 1024 * 1024):
        self.score_threshold = score_threshold
        self.nms_iou_threshold = nms_iou_threshold
        self.max_detection_boxes_num = max_detection_boxes_num
        self.strides = strides
        self.config = DefaultConfig if config is None else config
        # TN = positions per grid tile.  Must be a multiple of 8*128 so every
        # per-channel row is a dense (8, lane) vreg tile.  32768 positions ->
        # ~6 MiB double-buffered VMEM (safe on v5e 16 MiB scoped default too).
        self.max_tile_n = max_tile_n
        self.vmem_limit_bytes = vmem_limit_bytes

    # ---------------------------------------------------------------
    def decode(self, inputs):
        """Full decoded maps.

        Returns scores [B,N] f32, classes [B,N] int32 and boxes in
        channel-first layout [B, 5, N] (x1,y1,x2,y2,theta) -- the [B,N,5]
        transpose is deferred until after top-k (see __call__)."""
        cls_levels = inputs[0]      # list of [B, C_cls, H, W]
        reg_levels = inputs[2]      # list of [B, 5,     H, W]
        tc_levels = inputs[3]       # list of [B, C_tc,  H, W]
        tr_levels = inputs[4]       # list of [B, 1,     H, W]

        B = cls_levels[0].shape[0]
        c_cls = cls_levels[0].shape[1]
        c_tc = tc_levels[0].shape[1]
        N = sum(int(l.shape[2] * l.shape[3]) for l in cls_levels)

        # Tile-size selection.
        tn = min(self.max_tile_n, _round_up(N, _SUB))
        tn = max(_SUB, (tn // _SUB) * _SUB)
        n_pad = _round_up(N, tn)
        num_tiles = n_pad // tn
        lane = tn // 8
        rows_pad = n_pad // lane            # = num_tiles * 8

        # Per-position constants cx / cy / stride as a single [3, n_pad] array
        # (never broadcast over B; the kernel's index_map ignores the batch
        # grid axis so it is fetched once per tile).
        cxs, cys, strs = [], [], []
        for lvl, stride in zip(cls_levels, self.strides):
            h, w = int(lvl.shape[2]), int(lvl.shape[3])
            cx, cy = _coords_fmap2orig(h, w, stride)
            cxs.append(cx)
            cys.append(cy)
            strs.append(jnp.full((h * w,), float(stride), jnp.float32))
        if n_pad > N:
            tail = jnp.zeros((n_pad - N,), jnp.float32)
            cxs.append(tail); cys.append(tail); strs.append(tail)
        consts = jnp.stack([jnp.concatenate(cxs), jnp.concatenate(cys),
                            jnp.concatenate(strs)], axis=0)        # [3, n_pad]

        # Channel-first packing per branch (one concat pass each, pad folded
        # in), then a free row-major reshape so each grid tile is 8 rows of
        # `lane` positions -> dense (8, lane) vreg tiles inside the kernel.
        def to4(x, C):
            return x.reshape(B, C, rows_pad, lane)

        cls4 = to4(_cat_levels(cls_levels, n_pad), c_cls)
        reg4 = to4(_cat_levels(reg_levels, n_pad), 5)
        tc4 = to4(_cat_levels(tc_levels, n_pad), c_tc)
        tr4 = to4(_cat_levels(tr_levels, n_pad), 1)
        const3 = consts.reshape(3, rows_pad, lane)

        kernel = functools.partial(_detect_kernel, c_cls=c_cls, c_tc=c_tc)

        def bspec(C):
            return pl.BlockSpec((1, C, 8, lane), lambda n, b: (b, 0, n, 0))

        out4 = pl.pallas_call(
            kernel,
            out_shape=jax.ShapeDtypeStruct((B, 8, rows_pad, lane), jnp.float32),
            grid_spec=pltpu.PrefetchScalarGridSpec(
                num_scalar_prefetch=0,
                # Grid (tiles, batch): batch innermost so the constants tile
                # keeps the same block index across the batch loop (no re-DMA).
                grid=(num_tiles, B),
                in_specs=[bspec(c_cls), bspec(5), bspec(c_tc), bspec(1),
                          pl.BlockSpec((3, 8, lane), lambda n, b: (0, n, 0))],
                out_specs=bspec(8),
            ),
            compiler_params=pltpu.CompilerParams(
                dimension_semantics=("parallel", "parallel"),
                vmem_limit_bytes=self.vmem_limit_bytes),
            cost_estimate=pl.CostEstimate(
                flops=int(30 * B * n_pad),
                transcendentals=int(B * n_pad),
                bytes_accessed=int(((c_cls + 5 + c_tc + 1 + 8) * B + 3)
                                   * n_pad * 4)),
        )(cls4, reg4, tc4, tr4, const3)

        out = out4.reshape(B, 8, n_pad)
        boxes_cf = out[:, 0:5, :N]              # [B, 5, N] channel-first
        scores = out[:, 5, :N]                  # [B, N]
        classes = out[:, 6, :N].astype(jnp.int32)
        return scores, classes, boxes_cf

    # ---------------------------------------------------------------
    def __call__(self, inputs):
        scores, classes, boxes_cf = self.decode(inputs)
        N = scores.shape[-1]

        # top-k selection (plain JAX glue, matches torch.topk sorted/largest)
        max_num = min(self.max_detection_boxes_num, N)
        topk_scores, topk_idx = jax.lax.top_k(scores, max_num)
        topk_classes = jnp.take_along_axis(classes, topk_idx, axis=1)
        # Gather top-k columns from channel-first boxes, THEN transpose the
        # small [B,5,K] (avoids materializing a [B,N,5] transpose in HBM).
        topk_boxes_cf = jnp.take_along_axis(boxes_cf, topk_idx[:, None, :],
                                            axis=2)          # [B, 5, K]
        topk_boxes = jnp.transpose(topk_boxes_cf, (0, 2, 1))  # [B, K, 5]

        # TODO(synk): _post_process (score-threshold masking + NMS via
        # nms_wrapper) yields dynamic-length outputs and is not expressible
        # as a Pallas TPU kernel; returning the top-k detections instead.
        return topk_scores, topk_classes, topk_boxes


# --------------------------------------------------------------------------
# Pure-JAX reference (mirrors the PyTorch semantics) for verification
# --------------------------------------------------------------------------
def _reference_decode(inputs, strides):
    def cat(levels):
        B, C = levels[0].shape[:2]
        return jnp.concatenate([f.reshape(B, C, -1) for f in levels], axis=-1)

    cls_cat = cat(inputs[0])
    reg_cat = cat(inputs[2])
    tc_cat = cat(inputs[3])
    tr_cat = cat(inputs[4])
    cxs, cys, strs = [], [], []
    for lvl, s in zip(inputs[0], strides):
        h, w = lvl.shape[2], lvl.shape[3]
        cx, cy = _coords_fmap2orig(h, w, s)
        cxs.append(cx)
        cys.append(cy)
        strs.append(jnp.full((h * w,), float(s), jnp.float32))
    cx = jnp.concatenate(cxs)
    cy = jnp.concatenate(cys)
    st = jnp.concatenate(strs)

    cls_sig = jax.nn.sigmoid(cls_cat)                          # [B,C,N]
    scores = jnp.max(cls_sig, axis=1)                          # [B,N]
    classes = jnp.argmax(cls_sig, axis=1) + 1                  # [B,N]
    tc_sig = jax.nn.sigmoid(tc_cat)
    theta = (jnp.argmax(tc_sig, axis=1) + 1).astype(jnp.float32) * 10.0 \
        + tr_cat[:, 0, :]                                      # [B,N]
    l = reg_cat[:, 0, :] * st
    t = reg_cat[:, 1, :] * st
    r = reg_cat[:, 2, :] * st
    b = reg_cat[:, 3, :] * st
    x1 = cx[None] - l
    y1 = cy[None] - t
    x2 = cx[None] + r
    y2 = cy[None] + b
    boxes = jnp.stack([x1, y1, x2, y2, theta], axis=-1)        # [B,N,5]
    return scores, classes, boxes


if __name__ == "__main__":
    B = 2
    c_cls = DefaultConfig.class_num        # 3
    c_tc = DefaultConfig.theta_class_num   # 4

    def make_inputs(key, sizes):
        keys = jax.random.split(key, 4 * len(sizes))
        cls_l, reg_l, tc_l, tr_l = [], [], [], []
        ki = 0
        for (h, w) in sizes:
            cls_l.append(jax.random.normal(keys[ki], (B, c_cls, h, w), jnp.float32)); ki += 1
            reg_l.append(jax.random.normal(keys[ki], (B, 5, h, w), jnp.float32)); ki += 1
            tc_l.append(jax.random.normal(keys[ki], (B, c_tc, h, w), jnp.float32)); ki += 1
            tr_l.append(jax.random.normal(keys[ki], (B, 1, h, w), jnp.float32)); ki += 1
        # layout mirrors the PyTorch module: [cls, <unused>, reg, theta_cls, theta_reg]
        return [cls_l, None, reg_l, tc_l, tr_l]

    def check(head, inputs, strides, max_det):
        # verify full decoded maps against the pure-JAX reference
        s, c, b_cf = head.decode(inputs)
        jax.block_until_ready((s, c, b_cf))
        rs, rc, rb = _reference_decode(inputs, strides)
        np.testing.assert_allclose(np.asarray(s), np.asarray(rs), rtol=1e-5, atol=1e-5)
        np.testing.assert_array_equal(np.asarray(c), np.asarray(rc))
        np.testing.assert_allclose(np.transpose(np.asarray(b_cf), (0, 2, 1)),
                                   np.asarray(rb), rtol=1e-5, atol=1e-4)
        # verify the full (top-k) path runs and scores match the reference top-k
        ts, tcl, tb = head(inputs)
        jax.block_until_ready((ts, tcl, tb))
        ref_ts, _ = jax.lax.top_k(rs, min(max_det, rs.shape[-1]))
        np.testing.assert_allclose(np.asarray(ts), np.asarray(ref_ts), rtol=1e-5, atol=1e-5)
        assert tcl.shape == ts.shape and tb.shape == ts.shape + (5,)

    # Case 1: small, single tile (N = 64 + 16 = 80 -> one 1024-position tile)
    strides1 = (8, 16)
    inputs1 = make_inputs(jax.random.PRNGKey(0), ((8, 8), (4, 4)))
    head1 = DetectHead(score_threshold=0.3, nms_iou_threshold=0.5,
                       max_detection_boxes_num=20, strides=strides1)
    check(head1, inputs1, strides1, 20)

    # Case 2: multi-tile + padded tail (N = 1024 + 256 = 1280, TN = 1024 -> 2 tiles)
    strides2 = (8, 16)
    inputs2 = make_inputs(jax.random.PRNGKey(1), ((32, 32), (16, 16)))
    head2 = DetectHead(score_threshold=0.3, nms_iou_threshold=0.5,
                       max_detection_boxes_num=50, strides=strides2,
                       max_tile_n=1024)
    check(head2, inputs2, strides2, 50)

    print("KERNEL_OK")
</pallas_src>

<mosaic_0001>
module attributes {stable_mosaic.version = 11 : i64} {
  func.func @_detect_kernel(%arg0: i32, %arg1: i32, %arg2: memref<1x3x8x128xf32, #tpu.memory_space<vmem>>, %arg3: memref<1x5x8x128xf32, #tpu.memory_space<vmem>>, %arg4: memref<1x4x8x128xf32, #tpu.memory_space<vmem>>, %arg5: memref<1x1x8x128xf32, #tpu.memory_space<vmem>>, %arg6: memref<3x8x128xf32, #tpu.memory_space<vmem>>, %arg7: memref<1x8x8x128xf32, #tpu.memory_space<vmem>>) attributes {dimension_semantics = [#tpu.dimension_semantics<parallel>, #tpu.dimension_semantics<parallel>], iteration_bounds = array<i64: 1, 2>, scalar_prefetch = 0 : i64, scratch_operands = 0 : i64, tpu.core_type = #tpu.core_type<tc>, window_params = [{transform_indices = @transform_0, window_bounds = array<i64: 1, 3, 8, 128>}, {transform_indices = @transform_1, window_bounds = array<i64: 1, 5, 8, 128>}, {transform_indices = @transform_2, window_bounds = array<i64: 1, 4, 8, 128>}, {transform_indices = @transform_3, window_bounds = array<i64: 1, 1, 8, 128>}, {transform_indices = @transform_4, window_bounds = array<i64: 3, 8, 128>}, {transform_indices = @transform_5, window_bounds = array<i64: 1, 8, 8, 128>}]} {
    %c0 = arith.constant 0 : index
    %c0_0 = arith.constant 0 : index
    %c0_1 = arith.constant 0 : index
    %c0_2 = arith.constant 0 : index
    %0 = vector.load %arg2[%c0, %c0_0, %c0_1, %c0_2] : memref<1x3x8x128xf32, #tpu.memory_space<vmem>>, vector<1x1x8x128xf32>
    %1 = vector.shape_cast %0 : vector<1x1x8x128xf32> to vector<8x128xf32>
    %cst = arith.constant 0.000000e+00 : f32
    %2 = vector.broadcast %cst : f32 to vector<8x128xf32>
    %c0_3 = arith.constant 0 : index
    %c1 = arith.constant 1 : index
    %c0_4 = arith.constant 0 : index
    %c0_5 = arith.constant 0 : index
    %3 = vector.load %arg2[%c0_3, %c1, %c0_4, %c0_5] : memref<1x3x8x128xf32, #tpu.memory_space<vmem>>, vector<1x1x8x128xf32>
    %4 = vector.shape_cast %3 : vector<1x1x8x128xf32> to vector<8x128xf32>
    %5 = arith.cmpf ogt, %4, %1 : vector<8x128xf32>
    %6 = arith.select %5, %4, %1 : vector<8x128xi1>, vector<8x128xf32>
    %cst_6 = arith.constant 1.000000e+00 : f32
    %7 = vector.broadcast %cst_6 : f32 to vector<8x128xf32>
    %8 = arith.select %5, %7, %2 : vector<8x128xi1>, vector<8x128xf32>
    %c0_7 = arith.constant 0 : index
    %c2 = arith.constant 2 : index
    %c0_8 = arith.constant 0 : index
    %c0_9 = arith.constant 0 : index
    %9 = vector.load %arg2[%c0_7, %c2, %c0_8, %c0_9] : memref<1x3x8x128xf32, #tpu.memory_space<vmem>>, vector<1x1x8x128xf32>
    %10 = vector.shape_cast %9 : vector<1x1x8x128xf32> to vector<8x128xf32>
    %11 = arith.cmpf ogt, %10, %6 : vector<8x128xf32>
    %12 = arith.select %11, %10, %6 : vector<8x128xi1>, vector<8x128xf32>
    %cst_10 = arith.constant 2.000000e+00 : f32
    %13 = vector.broadcast %cst_10 : f32 to vector<8x128xf32>
    %14 = arith.select %11, %13, %8 : vector<8x128xi1>, vector<8x128xf32>
    %15 = arith.negf %12 : vector<8x128xf32>
    %16 = math.exp %15 : vector<8x128xf32>
    %cst_11 = arith.constant 1.000000e+00 : f32
    %17 = vector.broadcast %cst_11 : f32 to vector<8x128xf32>
    %18 = arith.addf %17, %16 : vector<8x128xf32>
    %19 = arith.divf %17, %18 : vector<8x128xf32>
    %cst_12 = arith.constant 1.000000e+00 : f32
    %20 = vector.broadcast %cst_12 : f32 to vector<8x128xf32>
    %21 = arith.addf %14, %20 : vector<8x128xf32>
    %c0_13 = arith.constant 0 : index
    %c0_14 = arith.constant 0 : index
    %c0_15 = arith.constant 0 : index
    %c0_16 = arith.constant 0 : index
    %22 = vector.load %arg4[%c0_13, %c0_14, %c0_15, %c0_16] : memref<1x4x8x128xf32, #tpu.memory_space<vmem>>, vector<1x1x8x128xf32>
    %23 = vector.shape_cast %22 : vector<1x1x8x128xf32> to vector<8x128xf32>
    %cst_17 = arith.constant 0.000000e+00 : f32
    %24 = vector.broadcast %cst_17 : f32 to vector<8x128xf32>
    %c0_18 = arith.constant 0 : index
    %c1_19 = arith.constant 1 : index
    %c0_20 = arith.constant 0 : index
    %c0_21 = arith.constant 0 : index
    %25 = vector.load %arg4[%c0_18, %c1_19, %c0_20, %c0_21] : memref<1x4x8x128xf32, #tpu.memory_space<vmem>>, vector<1x1x8x128xf32>
    %26 = vector.shape_cast %25 : vector<1x1x8x128xf32> to vector<8x128xf32>
    %27 = arith.cmpf ogt, %26, %23 : vector<8x128xf32>
    %28 = arith.select %27, %26, %23 : vector<8x128xi1>, vector<8x128xf32>
    %cst_22 = arith.constant 1.000000e+00 : f32
    %29 = vector.broadcast %cst_22 : f32 to vector<8x128xf32>
    %30 = arith.select %27, %29, %24 : vector<8x128xi1>, vector<8x128xf32>
    %c0_23 = arith.constant 0 : index
    %c2_24 = arith.constant 2 : index
    %c0_25 = arith.constant 0 : index
    %c0_26 = arith.constant 0 : index
    %31 = vector.load %arg4[%c0_23, %c2_24, %c0_25, %c0_26] : memref<1x4x8x128xf32, #tpu.memory_space<vmem>>, vector<1x1x8x128xf32>
    %32 = vector.shape_cast %31 : vector<1x1x8x128xf32> to vector<8x128xf32>
    %33 = arith.cmpf ogt, %32, %28 : vector<8x128xf32>
    %34 = arith.select %33, %32, %28 : vector<8x128xi1>, vector<8x128xf32>
    %cst_27 = arith.constant 2.000000e+00 : f32
    %35 = vector.broadcast %cst_27 : f32 to vector<8x128xf32>
    %36 = arith.select %33, %35, %30 : vector<8x128xi1>, vector<8x128xf32>
    %c0_28 = arith.constant 0 : index
    %c3 = arith.constant 3 : index
    %c0_29 = arith.constant 0 : index
    %c0_30 = arith.constant 0 : index
    %37 = vector.load %arg4[%c0_28, %c3, %c0_29, %c0_30] : memref<1x4x8x128xf32, #tpu.memory_space<vmem>>, vector<1x1x8x128xf32>
    %38 = vector.shape_cast %37 : vector<1x1x8x128xf32> to vector<8x128xf32>
    %39 = arith.cmpf ogt, %38, %34 : vector<8x128xf32>
    %cst_31 = arith.constant 3.000000e+00 : f32
    %40 = vector.broadcast %cst_31 : f32 to vector<8x128xf32>
    %41 = arith.select %39, %40, %36 : vector<8x128xi1>, vector<8x128xf32>
    %cst_32 = arith.constant 1.000000e+00 : f32
    %42 = vector.broadcast %cst_32 : f32 to vector<8x128xf32>
    %43 = arith.addf %41, %42 : vector<8x128xf32>
    %cst_33 = arith.constant 1.000000e+01 : f32
    %44 = vector.broadcast %cst_33 : f32 to vector<8x128xf32>
    %45 = arith.mulf %43, %44 : vector<8x128xf32>
    %c0_34 = arith.constant 0 : index
    %c0_35 = arith.constant 0 : index
    %c0_36 = arith.constant 0 : index
    %c0_37 = arith.constant 0 : index
    %46 = vector.load %arg5[%c0_34, %c0_35, %c0_36, %c0_37] : memref<1x1x8x128xf32, #tpu.memory_space<vmem>>, vector<1x1x8x128xf32>
    %47 = vector.shape_cast %46 : vector<1x1x8x128xf32> to vector<8x128xf32>
    %48 = arith.addf %45, %47 : vector<8x128xf32>
    %c0_38 = arith.constant 0 : index
    %c0_39 = arith.constant 0 : index
    %c0_40 = arith.constant 0 : index
    %49 = vector.load %arg6[%c0_38, %c0_39, %c0_40] : memref<3x8x128xf32, #tpu.memory_space<vmem>>, vector<1x8x128xf32>
    %50 = vector.shape_cast %49 : vector<1x8x128xf32> to vector<8x128xf32>
    %c1_41 = arith.constant 1 : index
    %c0_42 = arith.constant 0 : index
    %c0_43 = arith.constant 0 : index
    %51 = vector.load %arg6[%c1_41, %c0_42, %c0_43] : memref<3x8x128xf32, #tpu.memory_space<vmem>>, vector<1x8x128xf32>
    %52 = vector.shape_cast %51 : vector<1x8x128xf32> to vector<8x128xf32>
    %c2_44 = arith.constant 2 : index
    %c0_45 = arith.constant 0 : index
    %c0_46 = arith.constant 0 : index
    %53 = vector.load %arg6[%c2_44, %c0_45, %c0_46] : memref<3x8x128xf32, #tpu.memory_space<vmem>>, vector<1x8x128xf32>
    %54 = vector.shape_cast %53 : vector<1x8x128xf32> to vector<8x128xf32>
    %c0_47 = arith.constant 0 : index
    %c0_48 = arith.constant 0 : index
    %c0_49 = arith.constant 0 : index
    %c0_50 = arith.constant 0 : index
    %55 = vector.load %arg3[%c0_47, %c0_48, %c0_49, %c0_50] : memref<1x5x8x128xf32, #tpu.memory_space<vmem>>, vector<1x1x8x128xf32>
    %56 = vector.shape_cast %55 : vector<1x1x8x128xf32> to vector<8x128xf32>
    %57 = arith.mulf %56, %54 : vector<8x128xf32>
    %c0_51 = arith.constant 0 : index
    %c1_52 = arith.constant 1 : index
    %c0_53 = arith.constant 0 : index
    %c0_54 = arith.constant 0 : index
    %58 = vector.load %arg3[%c0_51, %c1_52, %c0_53, %c0_54] : memref<1x5x8x128xf32, #tpu.memory_space<vmem>>, vector<1x1x8x128xf32>
    %59 = vector.shape_cast %58 : vector<1x1x8x128xf32> to vector<8x128xf32>
    %60 = arith.mulf %59, %54 : vector<8x128xf32>
    %c0_55 = arith.constant 0 : index
    %c2_56 = arith.constant 2 : index
    %c0_57 = arith.constant 0 : index
    %c0_58 = arith.constant 0 : index
    %61 = vector.load %arg3[%c0_55, %c2_56, %c0_57, %c0_58] : memref<1x5x8x128xf32, #tpu.memory_space<vmem>>, vector<1x1x8x128xf32>
    %62 = vector.shape_cast %61 : vector<1x1x8x128xf32> to vector<8x128xf32>
    %63 = arith.mulf %62, %54 : vector<8x128xf32>
    %c0_59 = arith.constant 0 : index
    %c3_60 = arith.constant 3 : index
    %c0_61 = arith.constant 0 : index
    %c0_62 = arith.constant 0 : index
    %64 = vector.load %arg3[%c0_59, %c3_60, %c0_61, %c0_62] : memref<1x5x8x128xf32, #tpu.memory_space<vmem>>, vector<1x1x8x128xf32>
    %65 = vector.shape_cast %64 : vector<1x1x8x128xf32> to vector<8x128xf32>
    %66 = arith.mulf %65, %54 : vector<8x128xf32>
    %67 = arith.subf %50, %57 : vector<8x128xf32>
    %c0_63 = arith.constant 0 : index
    %c0_64 = arith.constant 0 : index
    %c0_65 = arith.constant 0 : index
    %c0_66 = arith.constant 0 : index
    %68 = vector.load %arg7[%c0_63, %c0_64, %c0_65, %c0_66] : memref<1x8x8x128xf32, #tpu.memory_space<vmem>>, vector<1x1x8x128xf32>
    %69 = vector.shape_cast %68 : vector<1x1x8x128xf32> to vector<8x128xf32>
    %70 = vector.shape_cast %67 : vector<8x128xf32> to vector<1x1x8x128xf32>
    tpu.vector_store %arg7[%c0_63, %c0_64, %c0_65, %c0_66], %70 {strides = array<i32>} : memref<1x8x8x128xf32, #tpu.memory_space<vmem>>, vector<1x1x8x128xf32>,
    %71 = arith.subf %52, %60 : vector<8x128xf32>
    %c0_67 = arith.constant 0 : index
    %c1_68 = arith.constant 1 : index
    %c0_69 = arith.constant 0 : index
    %c0_70 = arith.constant 0 : index
    %72 = vector.load %arg7[%c0_67, %c1_68, %c0_69, %c0_70] : memref<1x8x8x128xf32, #tpu.memory_space<vmem>>, vector<1x1x8x128xf32>
    %73 = vector.shape_cast %72 : vector<1x1x8x128xf32> to vector<8x128xf32>
    %74 = vector.shape_cast %71 : vector<8x128xf32> to vector<1x1x8x128xf32>
    tpu.vector_store %arg7[%c0_67, %c1_68, %c0_69, %c0_70], %74 {strides = array<i32>} : memref<1x8x8x128xf32, #tpu.memory_space<vmem>>, vector<1x1x8x128xf32>,
    %75 = arith.addf %50, %63 : vector<8x128xf32>
    %c0_71 = arith.constant 0 : index
    %c2_72 = arith.constant 2 : index
    %c0_73 = arith.constant 0 : index
    %c0_74 = arith.constant 0 : index
    %76 = vector.load %arg7[%c0_71, %c2_72, %c0_73, %c0_74] : memref<1x8x8x128xf32, #tpu.memory_space<vmem>>, vector<1x1x8x128xf32>
    %77 = vector.shape_cast %76 : vector<1x1x8x128xf32> to vector<8x128xf32>
    %78 = vector.shape_cast %75 : vector<8x128xf32> to vector<1x1x8x128xf32>
    tpu.vector_store %arg7[%c0_71, %c2_72, %c0_73, %c0_74], %78 {strides = array<i32>} : memref<1x8x8x128xf32, #tpu.memory_space<vmem>>, vector<1x1x8x128xf32>,
    %79 = arith.addf %52, %66 : vector<8x128xf32>
    %c0_75 = arith.constant 0 : index
    %c3_76 = arith.constant 3 : index
    %c0_77 = arith.constant 0 : index
    %c0_78 = arith.constant 0 : index
    %80 = vector.load %arg7[%c0_75, %c3_76, %c0_77, %c0_78] : memref<1x8x8x128xf32, #tpu.memory_space<vmem>>, vector<1x1x8x128xf32>
    %81 = vector.shape_cast %80 : vector<1x1x8x128xf32> to vector<8x128xf32>
    %82 = vector.shape_cast %79 : vector<8x128xf32> to vector<1x1x8x128xf32>
    tpu.vector_store %arg7[%c0_75, %c3_76, %c0_77, %c0_78], %82 {strides = array<i32>} : memref<1x8x8x128xf32, #tpu.memory_space<vmem>>, vector<1x1x8x128xf32>,
    %c0_79 = arith.constant 0 : index
    %c4 = arith.constant 4 : index
    %c0_80 = arith.constant 0 : index
    %c0_81 = arith.constant 0 : index
    %83 = vector.load %arg7[%c0_79, %c4, %c0_80, %c0_81] : memref<1x8x8x128xf32, #tpu.memory_space<vmem>>, vector<1x1x8x128xf32>
    %84 = vector.shape_cast %83 : vector<1x1x8x128xf32> to vector<8x128xf32>
    %85 = vector.shape_cast %48 : vector<8x128xf32> to vector<1x1x8x128xf32>
    tpu.vector_store %arg7[%c0_79, %c4, %c0_80, %c0_81], %85 {strides = array<i32>} : memref<1x8x8x128xf32, #tpu.memory_space<vmem>>, vector<1x1x8x128xf32>,
    %c0_82 = arith.constant 0 : index
    %c5 = arith.constant 5 : index
    %c0_83 = arith.constant 0 : index
    %c0_84 = arith.constant 0 : index
    %86 = vector.load %arg7[%c0_82, %c5, %c0_83, %c0_84] : memref<1x8x8x128xf32, #tpu.memory_space<vmem>>, vector<1x1x8x128xf32>
    %87 = vector.shape_cast %86 : vector<1x1x8x128xf32> to vector<8x128xf32>
    %88 = vector.shape_cast %19 : vector<8x128xf32> to vector<1x1x8x128xf32>
    tpu.vector_store %arg7[%c0_82, %c5, %c0_83, %c0_84], %88 {strides = array<i32>} : memref<1x8x8x128xf32, #tpu.memory_space<vmem>>, vector<1x1x8x128xf32>,
    %c0_85 = arith.constant 0 : index
    %c6 = arith.constant 6 : index
    %c0_86 = arith.constant 0 : index
    %c0_87 = arith.constant 0 : index
    %89 = vector.load %arg7[%c0_85, %c6, %c0_86, %c0_87] : memref<1x8x8x128xf32, #tpu.memory_space<vmem>>, vector<1x1x8x128xf32>
    %90 = vector.shape_cast %89 : vector<1x1x8x128xf32> to vector<8x128xf32>
    %91 = vector.shape_cast %21 : vector<8x128xf32> to vector<1x1x8x128xf32>
    tpu.vector_store %arg7[%c0_85, %c6, %c0_86, %c0_87], %91 {strides = array<i32>} : memref<1x8x8x128xf32, #tpu.memory_space<vmem>>, vector<1x1x8x128xf32>,
    %cst_88 = arith.constant 0.000000e+00 : f32
    %92 = vector.broadcast %cst_88 : f32 to vector<8x128xf32>
    %c0_89 = arith.constant 0 : index
    %c7 = arith.constant 7 : index
    %c0_90 = arith.constant 0 : index
    %c0_91 = arith.constant 0 : index
    %93 = vector.load %arg7[%c0_89, %c7, %c0_90, %c0_91] : memref<1x8x8x128xf32, #tpu.memory_space<vmem>>, vector<1x1x8x128xf32>
    %94 = vector.shape_cast %93 : vector<1x1x8x128xf32> to vector<8x128xf32>
    %95 = vector.shape_cast %92 : vector<8x128xf32> to vector<1x1x8x128xf32>
    tpu.vector_store %arg7[%c0_89, %c7, %c0_90, %c0_91], %95 {strides = array<i32>} : memref<1x8x8x128xf32, #tpu.memory_space<vmem>>, vector<1x1x8x128xf32>,
    return
  }
  func.func @transform_0(%arg0: i32, %arg1: i32) -> (i32, i32, i32, i32) {
    %c0_i32 = arith.constant 0 : i32
    %c0_i32_0 = arith.constant 0 : i32
    %c0_i32_1 = arith.constant 0 : i32
    return %arg1, %c0_i32, %arg0, %c0_i32_0 : i32, i32, i32, i32
  }
  func.func @transform_1(%arg0: i32, %arg1: i32) -> (i32, i32, i32, i32) {
    %c0_i32 = arith.constant 0 : i32
    %c0_i32_0 = arith.constant 0 : i32
    %c0_i32_1 = arith.constant 0 : i32
    return %arg1, %c0_i32, %arg0, %c0_i32_0 : i32, i32, i32, i32
  }
  func.func @transform_2(%arg0: i32, %arg1: i32) -> (i32, i32, i32, i32) {
    %c0_i32 = arith.constant 0 : i32
    %c0_i32_0 = arith.constant 0 : i32
    %c0_i32_1 = arith.constant 0 : i32
    return %arg1, %c0_i32, %arg0, %c0_i32_0 : i32, i32, i32, i32
  }
  func.func @transform_3(%arg0: i32, %arg1: i32) -> (i32, i32, i32, i32) {
    %c0_i32 = arith.constant 0 : i32
    %c0_i32_0 = arith.constant 0 : i32
    %c0_i32_1 = arith.constant 0 : i32
    return %arg1, %c0_i32, %arg0, %c0_i32_0 : i32, i32, i32, i32
  }
  func.func @transform_4(%arg0: i32, %arg1: i32) -> (i32, i32, i32) {
    %c0_i32 = arith.constant 0 : i32
    %c0_i32_0 = arith.constant 0 : i32
    %c0_i32_1 = arith.constant 0 : i32
    return %c0_i32, %arg0, %c0_i32_0 : i32, i32, i32
  }
  func.func @transform_5(%arg0: i32, %arg1: i32) -> (i32, i32, i32, i32) {
    %c0_i32 = arith.constant 0 : i32
    %c0_i32_0 = arith.constant 0 : i32
    %c0_i32_1 = arith.constant 0 : i32
    return %arg1, %c0_i32, %arg0, %c0_i32_0 : i32, i32, i32, i32
  }
}

</mosaic_0001>

<llo_original>
// kernel: tpu_custom_call.1
$region0: #{tpu_custom_call.1}
  #allocation0 [shape = 'u32[]', space=smem, size = 0x4, offset = 0x4, fixed_abs, tag = 'smem constant byte address 0x4 - core index']
  #allocation1 [shape = 'u32[144,128]{1,0:T(1,128)}', space=vmem, size = 0x12000, scoped, tag = 'internal scratch']
  %s0 = inlined_call_operand.hbm [shape: f32[2,3,8,128], index: 0, kind: input, shape index: {}]
  %s1 = inlined_call_operand.hbm [shape: f32[2,5,8,128], index: 1, kind: input, shape index: {}]
  %s2 = inlined_call_operand.hbm [shape: f32[2,4,8,128], index: 2, kind: input, shape index: {}]
  %s3 = inlined_call_operand.hbm [shape: f32[2,1,8,128], index: 3, kind: input, shape index: {}]
  %s4 = inlined_call_operand.hbm [shape: f32[3,8,128], index: 4, kind: input, shape index: {}]
  %s5 = inlined_call_operand.hbm [shape: f32[2,8,8,128], index: 5, kind: output, shape index: {}]
  %s6 = sld [smem:[#allocation0]]
  $region73: #{tpu_custom_call.1} parent=0
    _
  %s8 = ssub.s32 1, %s6
  %s9 = scalar_select 0, %s8, %s6
  $region1: #{tpu_custom_call.1} parent=0
    #allocation2 [shape = 'u8[24576]{0}', space=vmem, size = 0x6000, scoped, tag = 'input window, operand 0']
    #allocation3 [shape = 's32[2]{0}', space=sflag, size = 0x8, scoped, tag = 'scoped memory for tpu_custom_call.1']
    #allocation4 [shape = 's32[2]{0}', space=sflag, size = 0x8, scoped, tag = 'scoped memory for tpu_custom_call.1']
    #allocation5 [shape = 'u8[40960]{0}', space=vmem, size = 0xa000, scoped, tag = 'input window, operand 1']
    #allocation6 [shape = 's32[2]{0}', space=sflag, size = 0x8, scoped, tag = 'scoped memory for tpu_custom_call.1']
    #allocation7 [shape = 'u8[32768]{0}', space=vmem, size = 0x8000, scoped, tag = 'input window, operand 2']
    #allocation8 [shape = 'u8[8192]{0}', space=vmem, size = 0x2000, scoped, tag = 'input window, operand 3']
    #allocation9 [shape = 's32[2]{0}', space=sflag, size = 0x8, scoped, tag = 'scoped memory for tpu_custom_call.1']
    #allocation10 [shape = 'u8[12288]{0}', space=vmem, size = 0x3000, scoped, tag = 'input window, operand 4, single buffered']
    #allocation11 [shape = 'u8[65536]{0}', space=vmem, size = 0x10000, scoped, tag = 'output window, operand 0']
    %10 = vsyncpa [#allocation3], 0
    %s11 = scalar_lea.sflag [#allocation3], 1
    %12 = vsyncpa %s11, 0
    %13 = vsyncpa [#allocation6], 0
    %s14 = scalar_lea.sflag [#allocation6], 1
    %15 = vsyncpa %s14, 0
    %16 = vsyncpa [#allocation9], 0
    %s17 = scalar_lea.sflag [#allocation9], 1
    %18 = vsyncpa %s17, 0
    %19 = vsyncpa [#allocation4], 0
    %s20 = scalar_lea.sflag [#allocation4], 1
    %21 = vsyncpa %s20, 0
    loop: start=0, step=1, limit=4
    $region2: #{tpu_custom_call.1} parent=1 // loop_pre_header
      _
    $region3: #{tpu_custom_call.1} parent=1 // loop_header
      %s23 = sphi 0, %s27
      %p24 = scmp.ge.s32.totalorder %s23, 4
      %s30 = sphi 0, %s42
      %s31 = sphi 0, %s38
      %s32 = sphi 0, %s30
      %s33 = sphi 0, %s31
      %s34 = sphi 0, %s32
      %s35 = sphi 0, %s33
      %s47 = sphi 0, %s49
      %s50 = sphi 0, %s47
      %s51 = sphi 0, %s50
      %s67 = sphi 0, %s51
      %s75 = sphi 0, %s77
      %s78 = sphi 0, %s75
      %s79 = sphi 0, %s78
      %s95 = sphi 0, %s79
      %s103 = sphi 0, %s105
      %s106 = sphi 0, %s103
      %s107 = sphi 0, %s106
      %s123 = sphi 0, %s107
      %s131 = sphi 0, %s133
      %s134 = sphi 0, %s131
      %s135 = sphi 0, %s134
      %s151 = sphi 0, %s135
      %s157 = sphi 0, %s159
      %s160 = sphi 0, %s157
      %s161 = sphi 0, %s160
      %s177 = sphi 0, %s161
      %s185 = sphi 0, %s187
      %s188 = sphi 0, %s185
      %s189 = sphi 0, %s188
      %s205 = sphi 0, %s189
    $region4: #{tpu_custom_call.1} parent=1 // loop_header_branch
      %26 = sbr.rel (%p24) target = $region8
    $region5: #{tpu_custom_call.1} parent=1 // loop_body
      %s28 = ssub.s32 %s23, 1
      %s29 = ssub.s32 %s23, 2
      %s36 = sadd.s32 1, %s31
      %p37 = scmp.ge.s32.totalorder %s36, 2
      %s38 = scalar_select %p37, 0, %s36
      %s39 = sadd.s32 1, %s30
      %s40 = scalar_select %p37, %s39, %s30
      %p41 = scmp.ge.s32.totalorder %s40, 1
      %s42 = scalar_select %p41, 0, %s40
      %s43 = ssub.s32 %s31, %s38
      %s44 = ssub.s32 %s30, %s42
      %s45 = sor.u32 %s43, %s44
      %p46 = scmp.eq.s32.totalorder %s45, 0
      %s48 = sadd.s32 %s47, 1
      %s49 = scalar_select %p46, %s47, %s48
      %p52 = pneg %p46
      %p53 = scmp.eq.s32.totalorder %s23, 1
      %p54 = por %p52, %p53
      %p55 = scmp.ne.s32.totalorder %s47, %s50
      %p56 = scmp.eq.s32.totalorder %s23, 0
      %p57 = por %p55, %p56
      %p58 = scmp.ne.s32.totalorder %s47, %s50
      %p59 = scmp.eq.s32.totalorder %s28, 1
      %p60 = por %p58, %p59
      %p61 = scmp.ne.s32.totalorder %s50, %s51
      %p62 = scmp.eq.s32.totalorder %s28, 0
      %p63 = por %p61, %p62
      %p64 = scmp.ne.s32.totalorder %s50, %s51
      %p65 = scmp.eq.s32.totalorder %s29, 1
      %p66 = por %p64, %p65
      %p68 = scmp.ne.s32.totalorder %s51, %s67
      %p69 = scmp.eq.s32.totalorder %s29, 0
      %p70 = por %p68, %p69
      %s71 = ssub.s32 %s31, %s38
      %s72 = ssub.s32 %s30, %s42
      %s73 = sor.u32 %s71, %s72
      %p74 = scmp.eq.s32.totalorder %s73, 0
      %s76 = sadd.s32 %s75, 1
      %s77 = scalar_select %p74, %s75, %s76
      %p80 = pneg %p74
      %p81 = scmp.eq.s32.totalorder %s23, 1
      %p82 = por %p80, %p81
      %p83 = scmp.ne.s32.totalorder %s75, %s78
      %p84 = scmp.eq.s32.totalorder %s23, 0
      %p85 = por %p83, %p84
      %p86 = scmp.ne.s32.totalorder %s75, %s78
      %p87 = scmp.eq.s32.totalorder %s28, 1
      %p88 = por %p86, %p87
      %p89 = scmp.ne.s32.totalorder %s78, %s79
      %p90 = scmp.eq.s32.totalorder %s28, 0
      %p91 = por %p89, %p90
      %p92 = scmp.ne.s32.totalorder %s78, %s79
      %p93 = scmp.eq.s32.totalorder %s29, 1
      %p94 = por %p92, %p93
      %p96 = scmp.ne.s32.totalorder %s79, %s95
      %p97 = scmp.eq.s32.totalorder %s29, 0
      %p98 = por %p96, %p97
      %s99 = ssub.s32 %s31, %s38
      %s100 = ssub.s32 %s30, %s42
      %s101 = sor.u32 %s99, %s100
      %p102 = scmp.eq.s32.totalorder %s101, 0
      %s104 = sadd.s32 %s103, 1
      %s105 = scalar_select %p102, %s103, %s104
      %p108 = pneg %p102
      %p109 = scmp.eq.s32.totalorder %s23, 1
      %p110 = por %p108, %p109
      %p111 = scmp.ne.s32.totalorder %s103, %s106
      %p112 = scmp.eq.s32.totalorder %s23, 0
      %p113 = por %p111, %p112
      %p114 = scmp.ne.s32.totalorder %s103, %s106
      %p115 = scmp.eq.s32.totalorder %s28, 1
      %p116 = por %p114, %p115
      %p117 = scmp.ne.s32.totalorder %s106, %s107
      %p118 = scmp.eq.s32.totalorder %s28, 0
      %p119 = por %p117, %p118
      %p120 = scmp.ne.s32.totalorder %s106, %s107
      %p121 = scmp.eq.s32.totalorder %s29, 1
      %p122 = por %p120, %p121
      %p124 = scmp.ne.s32.totalorder %s107, %s123
      %p125 = scmp.eq.s32.totalorder %s29, 0
      %p126 = por %p124, %p125
      %s127 = ssub.s32 %s31, %s38
      %s128 = ssub.s32 %s30, %s42
      %s129 = sor.u32 %s127, %s128
      %p130 = scmp.eq.s32.totalorder %s129, 0
      %s132 = sadd.s32 %s131, 1
      %s133 = scalar_select %p130, %s131, %s132
      %p136 = pneg %p130
      %p137 = scmp.eq.s32.totalorder %s23, 1
      %p138 = por %p136, %p137
      %p139 = scmp.ne.s32.totalorder %s131, %s134
      %p140 = scmp.eq.s32.totalorder %s23, 0
      %p141 = por %p139, %p140
      %p142 = scmp.ne.s32.totalorder %s131, %s134
      %p143 = scmp.eq.s32.totalorder %s28, 1
      %p144 = por %p142, %p143
      %p145 = scmp.ne.s32.totalorder %s134, %s135
      %p146 = scmp.eq.s32.totalorder %s28, 0
      %p147 = por %p145, %p146
      %p148 = scmp.ne.s32.totalorder %s134, %s135
      %p149 = scmp.eq.s32.totalorder %s29, 1
      %p150 = por %p148, %p149
      %p152 = scmp.ne.s32.totalorder %s135, %s151
      %p153 = scmp.eq.s32.totalorder %s29, 0
      %p154 = por %p152, %p153
      %s155 = ssub.s32 %s30, %s42
      %p156 = scmp.eq.s32.totalorder %s155, 0
      %s158 = sadd.s32 %s157, 1
      %s159 = scalar_select %p156, %s157, %s158
      %p162 = pneg %p156
      %p163 = scmp.eq.s32.totalorder %s23, 1
      %p164 = por %p162, %p163
      %p165 = scmp.ne.s32.totalorder %s157, %s160
      %p166 = scmp.eq.s32.totalorder %s23, 0
      %p167 = por %p165, %p166
      %p168 = scmp.ne.s32.totalorder %s157, %s160
      %p169 = scmp.eq.s32.totalorder %s28, 1
      %p170 = por %p168, %p169
      %p171 = scmp.ne.s32.totalorder %s160, %s161
      %p172 = scmp.eq.s32.totalorder %s28, 0
      %p173 = por %p171, %p172
      %p174 = scmp.ne.s32.totalorder %s160, %s161
      %p175 = scmp.eq.s32.totalorder %s29, 1
      %p176 = por %p174, %p175
      %p178 = scmp.ne.s32.totalorder %s161, %s177
      %p179 = scmp.eq.s32.totalorder %s29, 0
      %p180 = por %p178, %p179
      %s181 = ssub.s32 %s31, %s38
      %s182 = ssub.s32 %s30, %s42
      %s183 = sor.u32 %s181, %s182
      %p184 = scmp.eq.s32.totalorder %s183, 0
      %s186 = sadd.s32 %s185, 1
      %s187 = scalar_select %p184, %s185, %s186
      %p190 = pneg %p184
      %p191 = scmp.eq.s32.totalorder %s23, 1
      %p192 = por %p190, %p191
      %p193 = scmp.ne.s32.totalorder %s185, %s188
      %p194 = scmp.eq.s32.totalorder %s23, 0
      %p195 = por %p193, %p194
      %p196 = scmp.ne.s32.totalorder %s185, %s188
      %p197 = scmp.eq.s32.totalorder %s28, 1
      %p198 = por %p196, %p197
      %p199 = scmp.ne.s32.totalorder %s188, %s189
      %p200 = scmp.eq.s32.totalorder %s28, 0
      %p201 = por %p199, %p200
      %p202 = scmp.ne.s32.totalorder %s188, %s189
      %p203 = scmp.eq.s32.totalorder %s29, 1
      %p204 = por %p202, %p203
      %p206 = scmp.ne.s32.totalorder %s189, %s205
      %p207 = scmp.eq.s32.totalorder %s29, 0
      %p208 = por %p206, %p207
      %p209 = scmp.le.s32.totalorder 1, %s23
      %p210 = scmp.lt.s32.totalorder %s23, 3
      %p211 = pnand %p209, %p210
      %p212 = pneg %p211
      // Predicated region
      $region9: #{tpu_custom_call.1} parent=5 // pred_check
        _
      $region10: #{tpu_custom_call.1} parent=5 // pred_check_branch
        %214 = sbr.rel (%p211) target = $region12
      $region11: #{tpu_custom_call.1} parent=5 // pred_region
        %s215 = ssub.s32 %s23, 1
        // Predicated region
        $region13: #{tpu_custom_call.1} parent=11 // pred_check
          %p216 = pneg %p173
        $region14: #{tpu_custom_call.1} parent=11 // pred_check_branch
          %218 = sbr.rel (%p216) target = $region16
        $region15: #{tpu_custom_call.1} parent=11 // pred_region
          %s220 = ssub.s32 384, 384
          %221 = vsyncadd [#allocation9], %s220
          %s222 = smul.addr %s32, 128
          %s223 = scalar_lea.hbm %s4, %s222
          %s224 = sshll.u32 [#allocation10], 4
          %s225 = int_to_ptr.vmem [resolvable:$true] %s224
          %230 = dma.hbm_to_vmem [thread:$0]  %s223, 384, %s225, [#allocation9], 128, 128, 8
        $region16: #{tpu_custom_call.1} parent=11 // pred_fallthru
          _
      $region12: #{tpu_custom_call.1} parent=5 // pred_fallthru
        _
      %p231 = scmp.lt.s32.totalorder %s23, 2
      // Predicated region
      $region17: #{tpu_custom_call.1} parent=5 // pred_check
        %p232 = pneg %p231
      $region18: #{tpu_custom_call.1} parent=5 // pred_check_branch
        %234 = sbr.rel (%p232) target = $region20
      $region19: #{tpu_custom_call.1} parent=5 // pred_region
        // Predicated region
        $region21: #{tpu_custom_call.1} parent=19 // pred_check
          %p235 = pneg %p57
        $region22: #{tpu_custom_call.1} parent=19 // pred_check_branch
          %237 = sbr.rel (%p235) target = $region24
        $region23: #{tpu_custom_call.1} parent=19 // pred_region
          %s238 = sand.u32 %s47, 1
          %s239 = scalar_lea.sflag [#allocation3], %s238
          %s240 = sand.u32 %s47, 1
          %s241 = smul.addr %s240, 24
          %s242 = scalar_lea.vmem [#allocation2], %s241
          %s244 = ssub.s32 384, 384
          %245 = vsyncadd %s239, %s244
          %s246 = smul.addr %s31, 3
          %s247 = sadd.s32 %s30, %s246
          %s248 = smul.addr %s247, 128
          %s249 = scalar_lea.hbm %s0, %s248
          %s250 = sshll.u32 %s242, 4
          %s251 = int_to_ptr.vmem [resolvable:$true] %s250
          %256 = dma.hbm_to_vmem [thread:$0]  %s249, 384, %s251, %s239, 128, 128, 8
        $region24: #{tpu_custom_call.1} parent=19 // pred_fallthru
          _
        // Predicated region
        $region25: #{tpu_custom_call.1} parent=19 // pred_check
          %p257 = pneg %p85
        $region26: #{tpu_custom_call.1} parent=19 // pred_check_branch
          %259 = sbr.rel (%p257) target = $region28
        $region27: #{tpu_custom_call.1} parent=19 // pred_region
          %s260 = sand.u32 %s23, 1
          %s261 = scalar_lea.sflag [#allocation6], %s260
          %s262 = sand.u32 %s75, 1
          %s263 = smul.addr %s262, 40
          %s264 = scalar_lea.vmem [#allocation5], %s263
          %s266 = ssub.s32 640, 640
          %267 = vsyncadd %s261, %s266
          %s268 = smul.addr %s31, 5
          %s269 = sadd.s32 %s30, %s268
          %s270 = smul.addr %s269, 128
          %s271 = scalar_lea.hbm %s1, %s270
          %s272 = sshll.u32 %s264, 4
          %s273 = int_to_ptr.vmem [resolvable:$true] %s272
          %278 = dma.hbm_to_vmem [thread:$0]  %s271, 640, %s273, %s261, 128, 128, 8
        $region28: #{tpu_custom_call.1} parent=19 // pred_fallthru
          _
        // Predicated region
        $region29: #{tpu_custom_call.1} parent=19 // pred_check
          %p279 = pneg %p113
        $region30: #{tpu_custom_call.1} parent=19 // pred_check_branch
          %281 = sbr.rel (%p279) target = $region32
        $region31: #{tpu_custom_call.1} parent=19 // pred_region
          %s282 = sand.u32 %s23, 1
          %s283 = scalar_lea.sflag [#allocation6], %s282
          %s284 = sand.u32 %s103, 1
          %s285 = smul.addr %s284, 32
          %s286 = scalar_lea.vmem [#allocation7], %s285
          %s288 = ssub.s32 512, 512
          %289 = vsyncadd %s283, %s288
          %s290 = smul.addr %s31, 4
          %s291 = sadd.s32 %s30, %s290
          %s292 = smul.addr %s291, 128
          %s293 = scalar_lea.hbm %s2, %s292
          %s294 = sshll.u32 %s286, 4
          %s295 = int_to_ptr.vmem [resolvable:$true] %s294
          %300 = dma.hbm_to_vmem [thread:$0]  %s293, 512, %s295, %s283, 128, 128, 8
        $region32: #{tpu_custom_call.1} parent=19 // pred_fallthru
          _
        // Predicated region
        $region33: #{tpu_custom_call.1} parent=19 // pred_check
          %p301 = pneg %p141
        $region34: #{tpu_custom_call.1} parent=19 // pred_check_branch
          %303 = sbr.rel (%p301) target = $region36
        $region35: #{tpu_custom_call.1} parent=19 // pred_region
          %s304 = sand.u32 %s23, 1
          %s305 = scalar_lea.sflag [#allocation9], %s304
          %s306 = sand.u32 %s131, 1
          %s307 = smul.addr %s306, 8
          %s308 = scalar_lea.vmem [#allocation8], %s307
          %s310 = ssub.s32 128, 128
          %311 = vsyncadd %s305, %s310
          %s312 = sadd.s32 %s30, %s31
          %s313 = smul.addr %s312, 128
          %s314 = scalar_lea.hbm %s3, %s313
          %s316 = sshll.u32 %s308, 4
          %s317 = int_to_ptr.vmem [resolvable:$true] %s316
          %319 = dma.hbm_to_vmem [thread:$0]  %s314, 128, %s317, %s305
        $region36: #{tpu_custom_call.1} parent=19 // pred_fallthru
          _
      $region20: #{tpu_custom_call.1} parent=5 // pred_fallthru
        _
      %p320 = scmp.le.s32.totalorder 1, %s23
      %p321 = scmp.lt.s32.totalorder %s23, 3
      %p322 = pnand %p320, %p321
      %p323 = pneg %p322
      // Predicated region
      $region37: #{tpu_custom_call.1} parent=5 // pred_check
        _
      $region38: #{tpu_custom_call.1} parent=5 // pred_check_branch
        %325 = sbr.rel (%p322) target = $region40
      $region39: #{tpu_custom_call.1} parent=5 // pred_region
        %s326 = ssub.s32 %s23, 1
        %s327 = sand.u32 %s50, 1
        %s328 = scalar_lea.sflag [#allocation3], %s327
        %s329 = sand.u32 %s50, 1
        %s330 = smul.addr %s329, 24
        %s331 = scalar_lea.vmem [#allocation2], %s330
        // Predicated region
        $region41: #{tpu_custom_call.1} parent=39 // pred_check
          %p332 = pneg %p63
        $region42: #{tpu_custom_call.1} parent=39 // pred_check_branch
          %334 = sbr.rel (%p332) target = $region44
        $region43: #{tpu_custom_call.1} parent=39 // pred_region
          %335 = dma.done %s328, 384
        $region44: #{tpu_custom_call.1} parent=39 // pred_fallthru
          _
        %s336 = sand.u32 %s28, 1
        %s337 = scalar_lea.sflag [#allocation6], %s336
        %s338 = sand.u32 %s78, 1
        %s339 = smul.addr %s338, 40
        %s340 = scalar_lea.vmem [#allocation5], %s339
        // Predicated region
        $region45: #{tpu_custom_call.1} parent=39 // pred_check
          %p341 = pneg %p91
        $region46: #{tpu_custom_call.1} parent=39 // pred_check_branch
          %343 = sbr.rel (%p341) target = $region48
        $region47: #{tpu_custom_call.1} parent=39 // pred_region
          %344 = dma.done %s337, 640
        $region48: #{tpu_custom_call.1} parent=39 // pred_fallthru
          _
        %s345 = sand.u32 %s28, 1
        %s346 = scalar_lea.sflag [#allocation6], %s345
        %s347 = sand.u32 %s106, 1
        %s348 = smul.addr %s347, 32
        %s349 = scalar_lea.vmem [#allocation7], %s348
        // Predicated region
        $region49: #{tpu_custom_call.1} parent=39 // pred_check
          %p350 = pneg %p119
        $region50: #{tpu_custom_call.1} parent=39 // pred_check_branch
          %352 = sbr.rel (%p350) target = $region52
        $region51: #{tpu_custom_call.1} parent=39 // pred_region
          %353 = dma.done %s346, 512
        $region52: #{tpu_custom_call.1} parent=39 // pred_fallthru
          _
        %s354 = sand.u32 %s28, 1
        %s355 = scalar_lea.sflag [#allocation9], %s354
        %s356 = sand.u32 %s134, 1
        %s357 = smul.addr %s356, 8
        %s358 = scalar_lea.vmem [#allocation8], %s357
        // Predicated region
        $region53: #{tpu_custom_call.1} parent=39 // pred_check
          %p359 = pneg %p147
        $region54: #{tpu_custom_call.1} parent=39 // pred_check_branch
          %361 = sbr.rel (%p359) target = $region56
        $region55: #{tpu_custom_call.1} parent=39 // pred_region
          %362 = dma.done %s355, 128
        $region56: #{tpu_custom_call.1} parent=39 // pred_fallthru
          _
        // Predicated region
        $region57: #{tpu_custom_call.1} parent=39 // pred_check
          %p363 = pneg %p173
        $region58: #{tpu_custom_call.1} parent=39 // pred_check_branch
          %365 = sbr.rel (%p363) target = $region60
        $region59: #{tpu_custom_call.1} parent=39 // pred_region
          %366 = dma.done [#allocation9], 384
        $region60: #{tpu_custom_call.1} parent=39 // pred_fallthru
          _
        %s367 = sand.u32 %s50, 1
        %s368 = scalar_lea.sflag [#allocation3], %s367
        %s369 = sand.u32 %s50, 1
        %s370 = smul.addr %s369, 24
        %s371 = scalar_lea.vmem [#allocation2], %s370
        %p372 = pneg %p63
        %p373 = pneg %p60
        %s374 = sand.u32 %s28, 1
        %s375 = scalar_lea.sflag [#allocation6], %s374
        %s376 = sand.u32 %s78, 1
        %s377 = smul.addr %s376, 40
        %s378 = scalar_lea.vmem [#allocation5], %s377
        %p379 = pneg %p91
        %p380 = pneg %p88
        %s381 = sand.u32 %s28, 1
        %s382 = scalar_lea.sflag [#allocation6], %s381
        %s383 = sand.u32 %s106, 1
        %s384 = smul.addr %s383, 32
        %s385 = scalar_lea.vmem [#allocation7], %s384
        %p386 = pneg %p119
        %p387 = pneg %p116
        %s388 = sand.u32 %s28, 1
        %s389 = scalar_lea.sflag [#allocation9], %s388
        %s390 = sand.u32 %s134, 1
        %s391 = smul.addr %s390, 8
        %s392 = scalar_lea.vmem [#allocation8], %s391
        %p393 = pneg %p147
        %p394 = pneg %p144
        %p395 = pneg %p173
        %p396 = pneg %p170
        %p397 = pneg %p201
        %p398 = pneg %p198
        %s399 = sand.u32 %s188, 1
        %s400 = scalar_lea.sflag [#allocation4], %s399
        %s401 = sand.u32 %s188, 1
        %s402 = smul.addr %s401, 64
        %s403 = scalar_lea.vmem [#allocation11], %s402
        %v404 = vld [vmem:[%s331] sm:$0xff]
        %s405 = scalar_lea.vmem %s331, 8 [#allocation2]
        %v406 = vld [vmem:[%s405] sm:$0xff]
        %vm407 = vcmp.gt.f32.partialorder %v406, %v404
        %v408 = vsel %vm407, %v406, %v404
        %v409 = vsel %vm407, 1.0, 0.0
        %s410 = scalar_lea.vmem %s331, 16 [#allocation2]
        %v411 = vld [vmem:[%s410] sm:$0xff]
        %vm412 = vcmp.gt.f32.partialorder %v411, %v408
        %v413 = vsel %vm412, %v411, %v408
        %v414 = vsel %vm412, 2.0, %v409
        %v415 = vxor.u32 %v413, 2147483648
        %v416 = vmul.f32 %v415, 1.442695
        %v417 = vpow.pop %v416
        %v418 = vadd.f32 %v417, 1.0
        %v419 = vrcp.pop %v418
        %v420 = vmul.f32 1.0, %v419
        %v421 = vadd.f32 %v414, 1.0
        %v422 = vld [vmem:[%s349] sm:$0xff]
        %s423 = scalar_lea.vmem %s349, 8 [#allocation7]
        %v424 = vld [vmem:[%s423] sm:$0xff]
        %vm425 = vcmp.gt.f32.partialorder %v424, %v422
        %v426 = vsel %vm425, %v424, %v422
        %v427 = vsel %vm425, 1.0, 0.0
        %s428 = scalar_lea.vmem %s349, 16 [#allocation7]
        %v429 = vld [vmem:[%s428] sm:$0xff]
        %vm430 = vcmp.gt.f32.partialorder %v429, %v426
        %v431 = vsel %vm430, %v429, %v426
        %v432 = vsel %vm430, 2.0, %v427
        %s433 = scalar_lea.vmem %s349, 24 [#allocation7]
        %v434 = vld [vmem:[%s433] sm:$0xff]
        %vm435 = vcmp.gt.f32.partialorder %v434, %v431
        %v436 = vsel %vm435, 3.0, %v432
        %v437 = vadd.f32 %v436, 1.0
        %v438 = vmul.f32 %v437, 10.0
        %v439 = vld [vmem:[%s358] sm:$0xff]
        %v440 = vadd.f32 %v438, %v439
        %v441 = vld [vmem:[#allocation10] sm:$0xff]
        %s442 = scalar_lea.vmem [#allocation10], 8
        %v443 = vld [vmem:[%s442] sm:$0xff]
        %s444 = scalar_lea.vmem [#allocation10], 16
        %v445 = vld [vmem:[%s444] sm:$0xff]
        %v446 = vld [vmem:[%s340] sm:$0xff]
        %v447 = vmul.f32 %v446, %v445
        %s448 = scalar_lea.vmem %s340, 8 [#allocation5]
        %v449 = vld [vmem:[%s448] sm:$0xff]
        %v450 = vmul.f32 %v449, %v445
        %s451 = scalar_lea.vmem %s340, 16 [#allocation5]
        %v452 = vld [vmem:[%s451] sm:$0xff]
        %v453 = vmul.f32 %v452, %v445
        %s454 = scalar_lea.vmem %s340, 24 [#allocation5]
        %v455 = vld [vmem:[%s454] sm:$0xff]
        %v456 = vmul.f32 %v455, %v445
        %v457 = vsub.f32 %v441, %v447
        %458 = vst [vmem:[%s403] sm:$0xff] %v457
        %v459 = vsub.f32 %v443, %v450
        %s460 = scalar_lea.vmem %s403, 8 [#allocation11]
        %461 = vst [vmem:[%s460] sm:$0xff] %v459
        %v462 = vadd.f32 %v441, %v453
        %s463 = scalar_lea.vmem %s403, 16 [#allocation11]
        %464 = vst [vmem:[%s463] sm:$0xff] %v462
        %v465 = vadd.f32 %v443, %v456
        %s466 = scalar_lea.vmem %s403, 24 [#allocation11]
        %467 = vst [vmem:[%s466] sm:$0xff] %v465
        %s468 = scalar_lea.vmem %s403, 32 [#allocation11]
        %469 = vst [vmem:[%s468] sm:$0xff] %v440
        %s470 = scalar_lea.vmem %s403, 40 [#allocation11]
        %471 = vst [vmem:[%s470] sm:$0xff] %v420
        %s472 = scalar_lea.vmem %s403, 48 [#allocation11]
        %473 = vst [vmem:[%s472] sm:$0xff] %v421
        %s474 = scalar_lea.vmem %s403, 56 [#allocation11]
        %475 = vst [vmem:[%s474] sm:$0xff] 0.0
        %s476 = sand.u32 %s188, 1
        %s477 = scalar_lea.sflag [#allocation4], %s476
        %s478 = sand.u32 %s188, 1
        %s479 = smul.addr %s478, 64
        %s480 = scalar_lea.vmem [#allocation11], %s479
        // Predicated region
        $region61: #{tpu_custom_call.1} parent=39 // pred_check
          %p481 = pneg %p198
        $region62: #{tpu_custom_call.1} parent=39 // pred_check_branch
          %483 = sbr.rel (%p481) target = $region64
        $region63: #{tpu_custom_call.1} parent=39 // pred_region
          %s485 = ssub.s32 1024, 1024
          %486 = vsyncadd %s477, %s485
          %s487 = smul.addr %s33, 8
          %s488 = sadd.s32 %s32, %s487
          %s489 = smul.addr %s488, 128
          %s490 = scalar_lea.hbm %s5, %s489
          %s491 = sshll.u32 %s480, 4
          %s492 = int_to_ptr.vmem [resolvable:$true] %s491
          %497 = dma.vmem_to_hbm [thread:$0]  %s492, 1024, %s490, %s477, 128, 128, 8
        $region64: #{tpu_custom_call.1} parent=39 // pred_fallthru
          _
      $region40: #{tpu_custom_call.1} parent=5 // pred_fallthru
        _
      %p498 = scmp.le.s32.totalorder 2, %s23
      // Predicated region
      $region65: #{tpu_custom_call.1} parent=5 // pred_check
        %p499 = pneg %p498
      $region66: #{tpu_custom_call.1} parent=5 // pred_check_branch
        %501 = sbr.rel (%p499) target = $region68
      $region67: #{tpu_custom_call.1} parent=5 // pred_region
        %s502 = ssub.s32 %s23, 2
        // Predicated region
        $region69: #{tpu_custom_call.1} parent=67 // pred_check
          %p503 = pneg %p204
        $region70: #{tpu_custom_call.1} parent=67 // pred_check_branch
          %505 = sbr.rel (%p503) target = $region72
        $region71: #{tpu_custom_call.1} parent=67 // pred_region
          %s506 = sand.u32 %s189, 1
          %s507 = scalar_lea.sflag [#allocation4], %s506
          %s508 = sand.u32 %s189, 1
          %s509 = smul.addr %s508, 64
          %s510 = scalar_lea.vmem [#allocation11], %s509
          %511 = dma.done %s507, 1024
        $region72: #{tpu_custom_call.1} parent=67 // pred_fallthru
          _
      $region68: #{tpu_custom_call.1} parent=5 // pred_fallthru
        _
    $region6: #{tpu_custom_call.1} parent=1 // loop_footer
      %s27 = sadd.s32 1, %s23
    $region7: #{tpu_custom_call.1} parent=1 // loop_footer_branch
      %22 = sbr.rel target = $region3
    $region8: #{tpu_custom_call.1} parent=1 // loop_exit
      _
    %512 = vsyncpa [#allocation3], 1
    %s513 = scalar_lea.sflag [#allocation3], 1
    %514 = vsyncpa %s513, 1
    %515 = vsyncpa [#allocation6], 1
    %s516 = scalar_lea.sflag [#allocation6], 1
    %517 = vsyncpa %s516, 1
    %518 = vsyncpa [#allocation9], 1
    %s519 = scalar_lea.sflag [#allocation9], 1
    %520 = vsyncpa %s519, 1
    %521 = vsyncpa [#allocation4], 1
    %s522 = scalar_lea.sflag [#allocation4], 1
    %523 = vsyncpa %s522, 1

</llo_original>
